<compile_context>
chip_gen: v7x
topology: tpu7x:2x2x1
jax: 0.10.0
libtpu: 0.0.40
codegen_flags: <defaults>
</compile_context>

<pallas_src>
import numpy as np
import jax
import jax.numpy as jnp
from jax.experimental import pallas as pl
from jax.experimental.pallas import tpu as pltpu


def quantum_generator_kernel(w_ref, sign_ref, x_ref, o_ref):
    sub, lanes = w_ref.shape  # static

    # fc layer on the VPU: theta_i = sum_j W[i, j] * x_j + b_i
    # (bias folded in: w_ref[i, n] == b_i and x_ref[0, n] == 1.0).
    x_b = jnp.broadcast_to(x_ref[...], (sub, lanes))
    theta = jnp.sum(w_ref[...] * x_b, axis=1, keepdims=True)          # (sub, 1)
    half = 0.5 * theta

    # bit[i, k] = i-th bit of basis index k, built in-register (no HBM table).
    # (sub <= 32 is asserted host-side so the 32-bit shift is always defined.)
    qubit = jax.lax.broadcasted_iota(jnp.int32, (sub, lanes), 0)
    basis = jax.lax.broadcasted_iota(jnp.int32, (sub, lanes), 1)
    bit = jax.lax.shift_right_logical(basis, qubit) & 1                # {0,1}

    # Single fused transcendental per element:
    #   cos(half)            when bit == 0
    #   cos(half - pi/2) = sin(half)   when bit == 1
    # Padding rows (theta == 0) contribute cos(0) = 1 on all consumed lanes.
    factors = jnp.cos(jnp.broadcast_to(half, (sub, lanes))
                      - bit.astype(jnp.float32) * (jnp.pi * 0.5))      # (sub, lanes)

    # All-rows product via an XLU-roll butterfly (stays on full (8,128) vregs).
    prod = factors
    shift = sub // 2
    while shift >= 1:
        prod = prod * pltpu.roll(prod, shift=shift, axis=0)
        shift //= 2
    # every row of `prod` now holds the product over all qubits

    # Re(sv[k]) = precomputed sign * |amplitude| product.
    amp_real = sign_ref[...] * prod[0:1, :]                            # (1, lanes)

    # Exact sigmoid via a single EUP tanh (no approx reciprocal error).
    o_ref[...] = 0.5 * jnp.tanh(0.5 * amp_real) + 0.5


def make_quantum_generator(W, b, *, lanes=128):
    """Precompute padded/augmented weights once; return (forward, forward_batch)."""
    n = W.shape[0]
    assert W.shape == (n, n) and b.shape == (n,)
    assert n + 1 <= lanes, "need one spare lane to fold the bias in"
    # Only sv[:n] (lane indices < n < 128) is ever consumed; the 32-bit shift in
    # the kernel also requires sub <= 32.
    assert n <= 32

    # Sublane extent: multiple of 8 (f32 tiling) and a power of two (roll tree).
    sub = 8
    while sub < n:
        sub *= 2

    # Augmented weight slab [W | b | 0...] — built once, outside the per-call path.
    w_np = np.zeros((sub, lanes), np.float32)
    w_np[:n, :n] = np.asarray(W, np.float32)
    w_np[:n, n] = np.asarray(b, np.float32)
    w_aug = jnp.asarray(w_np)

    # Input-independent sign row: Re((-i)^popcount(k)) = [1, 0, -1, 0][popcount % 4].
    ks = np.arange(lanes)
    pc = np.array([bin(int(k)).count("1") for k in ks])
    sign_np = np.where(pc % 2 == 1, 0.0,
                       np.where(pc % 4 == 2, -1.0, 1.0)).astype(np.float32)
    sign_row = jnp.asarray(sign_np).reshape(1, lanes)

    @jax.jit
    def forward_batch(xs):
        """xs: (B, n) latent vectors -> (B, n) generator outputs."""
        B = xs.shape[0]
        # Lane-dense latent slab: [x_0..x_{n-1}, 1 (bias lane), 0...]
        x_aug = jnp.zeros((B, 1, lanes), jnp.float32)
        x_aug = x_aug.at[:, 0, :n].set(xs.astype(jnp.float32))
        x_aug = x_aug.at[:, 0, n].set(1.0)

        out = pl.pallas_call(
            quantum_generator_kernel,
            out_shape=jax.ShapeDtypeStruct((B, 1, lanes), jnp.float32),
            grid=(B,),
            in_specs=[
                pl.BlockSpec((sub, lanes), lambda i: (0, 0)),       # weights: VMEM-resident
                pl.BlockSpec((1, lanes), lambda i: (0, 0)),         # sign row: VMEM-resident
                pl.BlockSpec((None, 1, lanes), lambda i: (i, 0, 0)),  # per-step latent
            ],
            out_specs=pl.BlockSpec((None, 1, lanes), lambda i: (i, 0, 0)),
            compiler_params=pltpu.CompilerParams(
                dimension_semantics=("parallel",)),
        )(w_aug, sign_row, x_aug)
        return out[:, 0, :n]

    def forward(x):
        """Single-sample interface matching the PyTorch module: x (n,) -> (n,)."""
        return forward_batch(x[None, :])[0]

    return forward, forward_batch


def reference_forward(x, W, b):
    """Pure numpy reference (RX-only statevector, real part, sigmoid) in f64."""
    n = x.shape[0]
    theta = np.asarray(x, np.float64) @ np.asarray(W, np.float64).T + np.asarray(b, np.float64)
    c = np.cos(theta * 0.5)
    s = np.sin(theta * 0.5)
    out = np.zeros(n, dtype=np.float64)
    for k in range(n):
        amp = 1.0 + 0.0j
        for i in range(n):
            amp = amp * ((-1j * s[i]) if ((k >> i) & 1) else c[i])
        out[k] = np.real(amp)
    return 1.0 / (1.0 + np.exp(-out))


if __name__ == "__main__":
    num_qubits = 8
    batch = 4

    key = jax.random.PRNGKey(0)
    kx, kw, kb = jax.random.split(key, 3)

    # Deterministic synthetic parameters (nn.Linear(num_qubits, num_qubits) shapes).
    xs = jax.random.normal(kx, (batch, num_qubits), dtype=jnp.float32)
    W = jax.random.normal(kw, (num_qubits, num_qubits), dtype=jnp.float32) * 0.3
    b = jax.random.normal(kb, (num_qubits,), dtype=jnp.float32) * 0.1

    forward, forward_batch = make_quantum_generator(W, b)

    ys = jax.block_until_ready(forward_batch(xs))          # batched path
    y0 = jax.block_until_ready(forward(xs[0]))             # single-sample path (B=1)

    for i in range(batch):
        y_ref = reference_forward(np.asarray(xs[i]), np.asarray(W), np.asarray(b))
        np.testing.assert_allclose(np.asarray(ys[i]), y_ref.astype(np.float32),
                                   rtol=1e-4, atol=1e-5)
    np.testing.assert_allclose(np.asarray(y0), np.asarray(ys[0]), rtol=1e-6, atol=1e-7)

    print("KERNEL_OK")
</pallas_src>

<mosaic_0001>
module attributes {stable_mosaic.version = 11 : i64} {
  func.func @quantum_generator_kernel(%arg0: i32, %arg1: memref<8x128xf32, #tpu.memory_space<vmem>>, %arg2: memref<1x128xf32, #tpu.memory_space<vmem>>, %arg3: memref<1x1x128xf32, #tpu.memory_space<vmem>>, %arg4: memref<1x1x128xf32, #tpu.memory_space<vmem>>) attributes {dimension_semantics = [#tpu.dimension_semantics<parallel>], iteration_bounds = array<i64: 4>, scalar_prefetch = 0 : i64, scratch_operands = 0 : i64, tpu.core_type = #tpu.core_type<tc>, window_params = [{pipeline_mode = #tpu.pipeline_mode<synchronous>, transform_indices = @transform_0, window_bounds = array<i64: 8, 128>}, {pipeline_mode = #tpu.pipeline_mode<synchronous>, transform_indices = @transform_1, window_bounds = array<i64: 1, 128>}, {transform_indices = @transform_2, window_bounds = array<i64: 1, 1, 128>}, {transform_indices = @transform_3, window_bounds = array<i64: 1, 1, 128>}]} {
    %c0 = arith.constant 0 : index
    %c0_0 = arith.constant 0 : index
    %c0_1 = arith.constant 0 : index
    %0 = vector.load %arg3[%c0, %c0_0, %c0_1] : memref<1x1x128xf32, #tpu.memory_space<vmem>>, vector<1x1x128xf32>
    %1 = vector.shape_cast %0 : vector<1x1x128xf32> to vector<1x128xf32>
    %2 = vector.shape_cast %1 : vector<1x128xf32> to vector<1x128xf32>
    %3 = vector.broadcast %2 : vector<1x128xf32> to vector<8x128xf32>
    %c0_2 = arith.constant 0 : index
    %c0_3 = arith.constant 0 : index
    %4 = vector.load %arg1[%c0_2, %c0_3] : memref<8x128xf32, #tpu.memory_space<vmem>>, vector<8x128xf32>
    %5 = arith.mulf %4, %3 : vector<8x128xf32>
    %cst = arith.constant dense<0.000000e+00> : vector<8xf32>
    %6 = vector.multi_reduction <add>, %5, %cst [1] : vector<8x128xf32> to vector<8xf32>
    %7 = vector.shape_cast %6 : vector<8xf32> to vector<8x1xf32>
    %cst_4 = arith.constant 5.000000e-01 : f32
    %8 = vector.broadcast %cst_4 : f32 to vector<8x1xf32>
    %9 = arith.mulf %8, %7 : vector<8x1xf32>
    %10 = tpu.iota {dimensions = array<i32: 0>} : vector<8x128xi32>
    %11 = tpu.iota {dimensions = array<i32: 1>} : vector<8x128xi32>
    %12 = arith.shrui %11, %10 : vector<8x128xi32>
    %c1_i32 = arith.constant 1 : i32
    %13 = vector.broadcast %c1_i32 : i32 to vector<8x128xi32>
    %14 = arith.andi %12, %13 : vector<8x128xi32>
    %15 = vector.shape_cast %9 : vector<8x1xf32> to vector<8x1xf32>
    %16 = vector.broadcast %15 : vector<8x1xf32> to vector<8x128xf32>
    %17 = arith.sitofp %14 : vector<8x128xi32> to vector<8x128xf32>
    %cst_5 = arith.constant 1.57079637 : f32
    %18 = vector.broadcast %cst_5 : f32 to vector<8x128xf32>
    %19 = arith.mulf %17, %18 : vector<8x128xf32>
    %20 = arith.subf %16, %19 : vector<8x128xf32>
    %21 = math.cos %20 : vector<8x128xf32>
    %c4_i32 = arith.constant 4 : i32
    %22 = tpu.dynamic_rotate %21 by %c4_i32 dim 0 : vector<8x128xf32>, i32 -> vector<8x128xf32>
    %23 = arith.mulf %21, %22 : vector<8x128xf32>
    %c2_i32 = arith.constant 2 : i32
    %24 = tpu.dynamic_rotate %23 by %c2_i32 dim 0 : vector<8x128xf32>, i32 -> vector<8x128xf32>
    %25 = arith.mulf %23, %24 : vector<8x128xf32>
    %c1_i32_6 = arith.constant 1 : i32
    %26 = tpu.dynamic_rotate %25 by %c1_i32_6 dim 0 : vector<8x128xf32>, i32 -> vector<8x128xf32>
    %27 = arith.mulf %25, %26 : vector<8x128xf32>
    %c0_7 = arith.constant 0 : index
    %c0_8 = arith.constant 0 : index
    %28 = vector.load %arg2[%c0_7, %c0_8] : memref<1x128xf32, #tpu.memory_space<vmem>>, vector<1x128xf32>
    %29 = vector.extract_strided_slice %27 {offsets = [0, 0], sizes = [1, 128], strides = [1, 1]} : vector<8x128xf32> to vector<1x128xf32>
    %30 = arith.mulf %28, %29 : vector<1x128xf32>
    %cst_9 = arith.constant 5.000000e-01 : f32
    %31 = vector.broadcast %cst_9 : f32 to vector<1x128xf32>
    %32 = arith.mulf %31, %30 : vector<1x128xf32>
    %33 = math.tanh %32 : vector<1x128xf32>
    %cst_10 = arith.constant 5.000000e-01 : f32
    %34 = vector.broadcast %cst_10 : f32 to vector<1x128xf32>
    %35 = arith.mulf %34, %33 : vector<1x128xf32>
    %cst_11 = arith.constant 5.000000e-01 : f32
    %36 = vector.broadcast %cst_11 : f32 to vector<1x128xf32>
    %37 = arith.addf %35, %36 : vector<1x128xf32>
    %c0_12 = arith.constant 0 : index
    %c0_13 = arith.constant 0 : index
    %c0_14 = arith.constant 0 : index
    %38 = vector.load %arg4[%c0_12, %c0_13, %c0_14] : memref<1x1x128xf32, #tpu.memory_space<vmem>>, vector<1x1x128xf32>
    %39 = vector.shape_cast %38 : vector<1x1x128xf32> to vector<1x128xf32>
    %40 = vector.shape_cast %37 : vector<1x128xf32> to vector<1x1x128xf32>
    tpu.vector_store %arg4[%c0_12, %c0_13, %c0_14], %40 {strides = array<i32>} : memref<1x1x128xf32, #tpu.memory_space<vmem>>, vector<1x1x128xf32>,
    return
  }
  func.func @transform_0(%arg0: i32) -> (i32, i32) {
    %c0_i32 = arith.constant 0 : i32
    %c0_i32_0 = arith.constant 0 : i32
    %c0_i32_1 = arith.constant 0 : i32
    return %c0_i32, %c0_i32_0 : i32, i32
  }
  func.func @transform_1(%arg0: i32) -> (i32, i32) {
    %c0_i32 = arith.constant 0 : i32
    %c0_i32_0 = arith.constant 0 : i32
    %c0_i32_1 = arith.constant 0 : i32
    return %c0_i32, %c0_i32_0 : i32, i32
  }
  func.func @transform_2(%arg0: i32) -> (i32, i32, i32) {
    %c0_i32 = arith.constant 0 : i32
    %c0_i32_0 = arith.constant 0 : i32
    %c0_i32_1 = arith.constant 0 : i32
    return %arg0, %c0_i32, %c0_i32_0 : i32, i32, i32
  }
  func.func @transform_3(%arg0: i32) -> (i32, i32, i32) {
    %c0_i32 = arith.constant 0 : i32
    %c0_i32_0 = arith.constant 0 : i32
    %c0_i32_1 = arith.constant 0 : i32
    return %arg0, %c0_i32, %c0_i32_0 : i32, i32, i32
  }
}

</mosaic_0001>

<llo_original>
// kernel: forward_batch.1
$region0: #{forward_batch.1}
  #allocation0 [shape = 'u32[]', space=smem, size = 0x4, offset = 0x4, fixed_abs, tag = 'smem constant byte address 0x4 - core index']
  #allocation1 [shape = 'u32[144,128]{1,0:T(1,128)}', space=vmem, size = 0x12000, scoped, tag = 'internal scratch']
  %s0 = inlined_call_operand.vmem [shape: f32[8,128], index: 0, kind: input, shape index: {}]
  %s1 = inlined_call_operand.vmem [shape: f32[1,128], index: 1, kind: input, shape index: {}]
  %s2 = inlined_call_operand.vmem [shape: f32[4,1,128], index: 2, kind: input, shape index: {}]
  %s3 = inlined_call_operand.hbm [shape: f32[4,1,128], index: 3, kind: output, shape index: {}]
  %s4 = sld [smem:[#allocation0]]
  $region45: #{forward_batch.1} parent=0
    _
  %s6 = ssub.s32 1, %s4
  %s7 = scalar_select 0, %s6, %s4
  $region1: #{forward_batch.1} parent=0
    #allocation2 [shape = 'u8[1024]{0}', space=vmem, size = 0x400, scoped, tag = 'output window, operand 0']
    #allocation3 [shape = 's32[2]{0}', space=sflag, size = 0x8, scoped, tag = 'scoped memory for forward_batch.1']
    %8 = vsyncpa [#allocation3], 0
    %s9 = scalar_lea.sflag [#allocation3], 1
    %10 = vsyncpa %s9, 0
    loop: start=0, step=1, limit=6
    $region2: #{forward_batch.1} parent=1 // loop_pre_header
      _
    $region3: #{forward_batch.1} parent=1 // loop_header
      %s12 = sphi 0, %s16
      %p13 = scmp.ge.s32.totalorder %s12, 6
      %s20 = sphi 0, %s20
      %s22 = sphi 0, %s20
      %s23 = sphi 0, %s22
      %s37 = sphi 0, %s23
      %s41 = sphi 0, %s41
      %s43 = sphi 0, %s41
      %s44 = sphi 0, %s43
      %s58 = sphi 0, %s44
      %s64 = sphi 0, %s66
      %s67 = sphi 0, %s64
      %s68 = sphi 0, %s67
      %s84 = sphi 0, %s68
      %s90 = sphi 0, %s92
      %s93 = sphi 0, %s90
      %s94 = sphi 0, %s93
      %s110 = sphi 0, %s94
    $region4: #{forward_batch.1} parent=1 // loop_header_branch
      %15 = sbr.rel (%p13) target = $region8
    $region5: #{forward_batch.1} parent=1 // loop_body
      %s17 = ssub.s32 %s12, 1
      %s18 = ssub.s32 %s12, 2
      %s19 = sadd.s32 %s12, 1
      %s21 = sadd.s32 %s20, 1
      %p24 = scmp.eq.s32.totalorder %s12, 3
      %p25 = scmp.ne.s32.totalorder %s20, %s22
      %p26 = scmp.eq.s32.totalorder %s12, 0
      %p27 = por %p25, %p26
      %p28 = scmp.ne.s32.totalorder %s20, %s22
      %p29 = scmp.eq.s32.totalorder %s17, 3
      %p30 = por %p28, %p29
      %p31 = scmp.ne.s32.totalorder %s22, %s23
      %p32 = scmp.eq.s32.totalorder %s17, 0
      %p33 = por %p31, %p32
      %p34 = scmp.ne.s32.totalorder %s22, %s23
      %p35 = scmp.eq.s32.totalorder %s18, 3
      %p36 = por %p34, %p35
      %p38 = scmp.ne.s32.totalorder %s23, %s37
      %p39 = scmp.eq.s32.totalorder %s18, 0
      %p40 = por %p38, %p39
      %s42 = sadd.s32 %s41, 1
      %p45 = scmp.eq.s32.totalorder %s12, 3
      %p46 = scmp.ne.s32.totalorder %s41, %s43
      %p47 = scmp.eq.s32.totalorder %s12, 0
      %p48 = por %p46, %p47
      %p49 = scmp.ne.s32.totalorder %s41, %s43
      %p50 = scmp.eq.s32.totalorder %s17, 3
      %p51 = por %p49, %p50
      %p52 = scmp.ne.s32.totalorder %s43, %s44
      %p53 = scmp.eq.s32.totalorder %s17, 0
      %p54 = por %p52, %p53
      %p55 = scmp.ne.s32.totalorder %s43, %s44
      %p56 = scmp.eq.s32.totalorder %s18, 3
      %p57 = por %p55, %p56
      %p59 = scmp.ne.s32.totalorder %s44, %s58
      %p60 = scmp.eq.s32.totalorder %s18, 0
      %p61 = por %p59, %p60
      %s62 = ssub.s32 %s12, %s19
      %p63 = scmp.eq.s32.totalorder %s62, 0
      %s65 = sadd.s32 %s64, 1
      %s66 = scalar_select %p63, %s64, %s65
      %p69 = pneg %p63
      %p70 = scmp.eq.s32.totalorder %s12, 3
      %p71 = por %p69, %p70
      %p72 = scmp.ne.s32.totalorder %s64, %s67
      %p73 = scmp.eq.s32.totalorder %s12, 0
      %p74 = por %p72, %p73
      %p75 = scmp.ne.s32.totalorder %s64, %s67
      %p76 = scmp.eq.s32.totalorder %s17, 3
      %p77 = por %p75, %p76
      %p78 = scmp.ne.s32.totalorder %s67, %s68
      %p79 = scmp.eq.s32.totalorder %s17, 0
      %p80 = por %p78, %p79
      %p81 = scmp.ne.s32.totalorder %s67, %s68
      %p82 = scmp.eq.s32.totalorder %s18, 3
      %p83 = por %p81, %p82
      %p85 = scmp.ne.s32.totalorder %s68, %s84
      %p86 = scmp.eq.s32.totalorder %s18, 0
      %p87 = por %p85, %p86
      %s88 = ssub.s32 %s12, %s19
      %p89 = scmp.eq.s32.totalorder %s88, 0
      %s91 = sadd.s32 %s90, 1
      %s92 = scalar_select %p89, %s90, %s91
      %p95 = pneg %p89
      %p96 = scmp.eq.s32.totalorder %s12, 3
      %p97 = por %p95, %p96
      %p98 = scmp.ne.s32.totalorder %s90, %s93
      %p99 = scmp.eq.s32.totalorder %s12, 0
      %p100 = por %p98, %p99
      %p101 = scmp.ne.s32.totalorder %s90, %s93
      %p102 = scmp.eq.s32.totalorder %s17, 3
      %p103 = por %p101, %p102
      %p104 = scmp.ne.s32.totalorder %s93, %s94
      %p105 = scmp.eq.s32.totalorder %s17, 0
      %p106 = por %p104, %p105
      %p107 = scmp.ne.s32.totalorder %s93, %s94
      %p108 = scmp.eq.s32.totalorder %s18, 3
      %p109 = por %p107, %p108
      %p111 = scmp.ne.s32.totalorder %s94, %s110
      %p112 = scmp.eq.s32.totalorder %s18, 0
      %p113 = por %p111, %p112
      %p114 = scmp.le.s32.totalorder 1, %s12
      %p115 = scmp.lt.s32.totalorder %s12, 5
      %p116 = pnand %p114, %p115
      %p117 = pneg %p116
      // Predicated region
      $region9: #{forward_batch.1} parent=5 // pred_check
        _
      $region10: #{forward_batch.1} parent=5 // pred_check_branch
        %119 = sbr.rel (%p116) target = $region12
      $region11: #{forward_batch.1} parent=5 // pred_region
        %s120 = ssub.s32 %s12, 1
        // Predicated region
        $region13: #{forward_batch.1} parent=11 // pred_check
          %p121 = pneg %p33
        $region14: #{forward_batch.1} parent=11 // pred_check_branch
          %123 = sbr.rel (%p121) target = $region16
        $region15: #{forward_batch.1} parent=11 // pred_region
          _
        $region16: #{forward_batch.1} parent=11 // pred_fallthru
          _
        // Predicated region
        $region17: #{forward_batch.1} parent=11 // pred_check
          %p124 = pneg %p54
        $region18: #{forward_batch.1} parent=11 // pred_check_branch
          %126 = sbr.rel (%p124) target = $region20
        $region19: #{forward_batch.1} parent=11 // pred_region
          _
        $region20: #{forward_batch.1} parent=11 // pred_fallthru
          _
      $region12: #{forward_batch.1} parent=5 // pred_fallthru
        _
      %p127 = scmp.lt.s32.totalorder %s12, 4
      // Predicated region
      $region21: #{forward_batch.1} parent=5 // pred_check
        %p128 = pneg %p127
      $region22: #{forward_batch.1} parent=5 // pred_check_branch
        %130 = sbr.rel (%p128) target = $region24
      $region23: #{forward_batch.1} parent=5 // pred_region
        // Predicated region
        $region25: #{forward_batch.1} parent=23 // pred_check
          %p131 = pneg %p74
        $region26: #{forward_batch.1} parent=23 // pred_check_branch
          %133 = sbr.rel (%p131) target = $region28
        $region27: #{forward_batch.1} parent=23 // pred_region
          %p134 = scmp.lt.s32.totalorder %s12, 3
          %s135 = scalar_select %p134, %s12, 3
          %s136 = scalar_lea.vmem %s2, %s135
        $region28: #{forward_batch.1} parent=23 // pred_fallthru
          _
      $region24: #{forward_batch.1} parent=5 // pred_fallthru
        _
      %p137 = scmp.le.s32.totalorder 1, %s12
      %p138 = scmp.lt.s32.totalorder %s12, 5
      %p139 = pnand %p137, %p138
      %p140 = pneg %p139
      // Predicated region
      $region29: #{forward_batch.1} parent=5 // pred_check
        _
      $region30: #{forward_batch.1} parent=5 // pred_check_branch
        %142 = sbr.rel (%p139) target = $region32
      $region31: #{forward_batch.1} parent=5 // pred_region
        %s143 = ssub.s32 %s12, 1
        %p144 = pneg %p33
        %p145 = pneg %p30
        %p146 = pneg %p54
        %p147 = pneg %p51
        %p148 = scmp.lt.s32.totalorder %s17, 3
        %s149 = scalar_select %p148, %s17, 3
        %s150 = scalar_lea.vmem %s2, %s149
        %p151 = pneg %p80
        %p152 = pneg %p77
        %p153 = pneg %p106
        %p154 = pneg %p103
        %s155 = sand.u32 %s93, 1
        %s156 = scalar_lea.sflag [#allocation3], %s155
        %s157 = sand.u32 %s93, 1
        %s158 = scalar_lea.vmem [#allocation2], %s157
        %p159 = scmp.lt.s32.totalorder %s17, 3
        %s160 = scalar_select %p159, %s17, 3
        %s161 = scalar_lea.vmem %s2, %s160
        %v162 = vld [vmem:[%s161] sm:$0x1]
        %v164 = vlaneseq
        %v165 = vshrl.u32 %v164, 7
        %v166 = vsub.s32 0, %v165
        %v167 = vrot.slane %v162, %v166
        %v169 = vld [vmem:[%s0] sm:$0xff]
        %v170 = vmul.f32 %v169, %v167
        %171 = vadd.xlane.f32.xlu0 %v170
        %v172 = vpop.xlane.xlu0 %171
        %v173 = vmul.f32 %v172, 0.5
        %v174 = vlaneseq
        %v175 = vshrl.u32 %v174, 7
        %v176 = vlaneseq
        %v177 = vand.u32 %v176, 127
        %v178 = vshrl.u32 %v177, %v175
        %v179 = vand.u32 %v178, 1
        %v180 = vcvt.s32.f32 %v179
        %v181 = vmul.f32 %v180, 1.5707964
        %v182 = vsub.f32 %v173, %v181
        %v183 = vand.u32 2147483647, %v182
        %vm184 = vcmp.le.f32.partialorder %v183, 0.7853982
        %vm185 = vcmp.lt.s32.totalorder %v182, 0
        %v186 = vand.u32 %v182, 2139095040
        %v187 = vshrl.u32 %v186, 23
        %v188 = vsub.s32 %v187, 127
        %v189 = vand.u32 2147483647, %v182
        %v190 = vand.u32 %v189, 8388607
        %v191 = vor.u32 %v190, 8388608
        %v192 = vsub.s32 0, %v191
        %v193 = vadd.s32 %v188, 1
        %vm194 = vcmp.gt.s32.totalorder %v193, 0
        %v195 = vsel %vm194, %v193, 0
        %v196 = vshrl.u32 %v195, 5
        %v197 = vand.u32 %v195, 31
        %v198 = vsub.s32 32, %v197
        %v199 = vshrl.u32 683565275, %v198
        %v200 = vshll.u32 683565275, %v197
        %v201 = vshrl.u32 2475754826, %v198
        %v202 = vor.u32 %v200, %v201
        %v203 = vshll.u32 2475754826, %v197
        %v204 = vshrl.u32 2131351028, %v198
        %v205 = vor.u32 %v203, %v204
        %v206 = vshll.u32 2131351028, %v197
        %v207 = vshrl.u32 2102212464, %v198
        %v208 = vor.u32 %v206, %v207
        %v209 = vshll.u32 2102212464, %v197
        %v210 = vshrl.u32 920167782, %v198
        %v211 = vor.u32 %v209, %v210
        %v212 = vshll.u32 920167782, %v197
        %v213 = vshrl.u32 1326507024, %v198
        %v214 = vor.u32 %v212, %v213
        %vm215 = vcmp.lt.s32.totalorder %v196, 1
        %vm216 = vcmp.lt.s32.totalorder %v196, 2
        %vm217 = vcmp.lt.s32.totalorder %v196, 3
        %vm218 = vcmp.lt.s32.totalorder %v196, 4
        %v219 = vsel %vm215, %v199, %v202
        %v220 = vsel %vm218, %v208, 2102212464
        %v221 = vsel %vm217, %v205, %v220
        %v222 = vsel %vm216, %v219, %v221
        %v223 = vsel %vm215, %v202, %v205
        %v224 = vsel %vm218, %v211, 920167782
        %v225 = vsel %vm217, %v208, %v224
        %v226 = vsel %vm216, %v223, %v225
        %v227 = vsel %vm215, %v205, %v208
        %v228 = vsel %vm218, %v214, 1326507024
        %v229 = vsel %vm217, %v211, %v228
        %v230 = vsel %vm216, %v227, %v229
        %v231 = vshll.u32 %v191, 8
        %v232 = vmul.u32.u64.compose %v231, %v230
        %v233 = vextract.low.u32 %v232
        %v234 = vextract.high.u32 %v232
        %v235 = vmul.u32.u64.compose %v231, %v226
        %v236 = vextract.low.u32 %v235
        %v237 = vextract.high.u32 %v235
        %v238 = vmul.u32 %v231, %v222
        %v239 = vadd.s32 %v234, %v236
        %vm240 = vc.u32 %v234, %v236
        %v241 = vadd.s32 %v237, 1
        %v242 = vsel %vm240, %v241, %v237
        %v243 = vadd.s32 %v238, %v242
        %v244 = vadd.s32 %v243, 536870912
        %v245 = vshrl.u32 %v244, 30
        %v246 = vshll.u32 %v245, 30
        %v247 = vsub.s32 %v243, %v246
        %vm248 = vcmp.lt.s32.totalorder %v247, 0
        %v249 = vsub.s32 0, %v247
        %v250 = vsel %vm248, %v249, %v247
        %v251 = vclz %v250
        %v252 = vsub.s32 %v251, 2
        %vm253 = vcmp.gt.s32.totalorder 0, %v252
        %v254 = vsel %vm253, 0, %v252
        %v255 = vsub.s32 32, %v254
        %v256 = vshll.u32 %v247, %v254
        %v257 = vshrl.u32 %v239, %v255
        %v258 = vor.u32 %v256, %v257
        %v259 = vsub.s32 4294967266, %v254
        %v260 = vadd.s32 %v259, 127
        %v261 = vshll.u32 %v260, 23
        %v262 = vor.u32 4788187, %v261
        %v263 = vand.u32 2147483647, %v262
        %v265 = vcvt.s32.f32 %v258
        %v266 = vmul.f32 %v265, %v263
        %v267 = vxor.u32 %v266, 2147483648
        %v268 = vsel %vm185, %v267, %v266
        %v269 = vsub.s32 4, %v245
        %v270 = vsel %vm185, %v269, %v245
        %v271 = vsel %vm184, %v182, %v268
        %v272 = vsel %vm184, 0, %v270
        %v273 = vcosq.f32.pop %v271
        %v274 = vsinq.f32.pop %v271
        %vm275 = vweird.f32 %v182
        %v276 = vand.u32 %v272, 3
        %vm277 = vcmp.lt.s32.totalorder %v276, 2
        %vm278 = vcmp.eq.s32.totalorder %v276, 0
        %v279 = vxor.u32 %v274, 2147483648
        %v280 = vsel %vm278, %v273, %v279
        %vm281 = vcmp.eq.s32.totalorder %v276, 2
        %v282 = vxor.u32 %v273, 2147483648
        %v283 = vsel %vm281, %v282, %v274
        %v284 = vsel %vm277, %v280, %v283
        %v285 = vsel %vm275, nan, %v284
        %v286 = vrot.slane %v285, 4
        %v287 = vmul.f32 %v285, %v286
        %v288 = vrot.slane %v287, 6
        %v289 = vmul.f32 %v287, %v288
        %v290 = vrot.slane %v289, 7
        %v291 = vmul.f32 %v289, %v290
        %v292 = vld [vmem:[%s1] sm:$0x1]
        %v293 = vmul.f32 %v292, %v291
        %v294 = vmul.f32 %v293, 0.5
        %v295 = vtanh.pop %v294
        %v296 = vmul.f32 %v295, 0.5
        %v297 = vadd.f32 %v296, 0.5
        %298 = vst [vmem:[%s158] sm:$0x1] %v297
        %s299 = sand.u32 %s93, 1
        %s300 = scalar_lea.sflag [#allocation3], %s299
        %s301 = sand.u32 %s93, 1
        %s302 = scalar_lea.vmem [#allocation2], %s301
        // Predicated region
        $region33: #{forward_batch.1} parent=31 // pred_check
          %p303 = pneg %p103
        $region34: #{forward_batch.1} parent=31 // pred_check_branch
          %305 = sbr.rel (%p303) target = $region36
        $region35: #{forward_batch.1} parent=31 // pred_region
          %s307 = ssub.s32 16, 16
          %308 = vsyncadd %s300, %s307
          %s309 = smul.addr %s17, 16
          %s310 = scalar_lea.hbm %s3, %s309
          %s312 = sshll.u32 %s302, 4
          %s313 = int_to_ptr.vmem [resolvable:$true] %s312
          %315 = dma.vmem_to_hbm [thread:$0]  %s313, 16, %s310, %s300
        $region36: #{forward_batch.1} parent=31 // pred_fallthru
          _
      $region32: #{forward_batch.1} parent=5 // pred_fallthru
        _
      %p316 = scmp.le.s32.totalorder 2, %s12
      // Predicated region
      $region37: #{forward_batch.1} parent=5 // pred_check
        %p317 = pneg %p316
      $region38: #{forward_batch.1} parent=5 // pred_check_branch
        %319 = sbr.rel (%p317) target = $region40
      $region39: #{forward_batch.1} parent=5 // pred_region
        %s320 = ssub.s32 %s12, 2
        // Predicated region
        $region41: #{forward_batch.1} parent=39 // pred_check
          %p321 = pneg %p109
        $region42: #{forward_batch.1} parent=39 // pred_check_branch
          %323 = sbr.rel (%p321) target = $region44
        $region43: #{forward_batch.1} parent=39 // pred_region
          %s324 = sand.u32 %s94, 1
          %s325 = scalar_lea.sflag [#allocation3], %s324
          %s326 = sand.u32 %s94, 1
          %s327 = scalar_lea.vmem [#allocation2], %s326
          %328 = dma.done %s325, 16
        $region44: #{forward_batch.1} parent=39 // pred_fallthru
          _
      $region40: #{forward_batch.1} parent=5 // pred_fallthru
        _
    $region6: #{forward_batch.1} parent=1 // loop_footer
      %s16 = sadd.s32 1, %s12
    $region7: #{forward_batch.1} parent=1 // loop_footer_branch
      %11 = sbr.rel target = $region3
    $region8: #{forward_batch.1} parent=1 // loop_exit
      _
    %329 = vsyncpa [#allocation3], 1
    %s330 = scalar_lea.sflag [#allocation3], 1
    %331 = vsyncpa %s330, 1

</llo_original>
